<compile_context>
chip_gen: v6e
topology: v6e:2x2x1
jax: 0.10.0
libtpu: 0.0.40
codegen_flags: <defaults>
</compile_context>

<pallas_src>
import jax
import jax.numpy as jnp
import numpy as np
from jax.experimental import pallas as pl
from jax.experimental.pallas import tpu as pltpu

D_MODEL = 128   # lane-aligned (multiple of 128)
D_FF = 512      # lane-aligned (multiple of 128)
TM_MAX = 1024   # row tile (multiple of 8 sublanes); fits v5e's 16 MiB scoped VMEM


def _ffn_kernel(x_ref, w1_ref, b1_ref, w2_ref, b2_ref, o_ref):
    # x_ref: (TM, d_model) f32      w1_ref: (d_model, d_ff) bf16   b1_ref: (1, d_ff) f32
    # w2_ref: (d_ff, d_model) bf16  b2_ref: (1, d_model) f32       o_ref: (TM, d_model)
    x_bf = x_ref[...].astype(jnp.bfloat16)                 # in-kernel cast (VPU, free-ish)
    h = jnp.dot(x_bf, w1_ref[...],
                preferred_element_type=jnp.float32)        # MXU, f32 accumulate
    h = jnp.maximum(h + b1_ref[...], 0.0)                  # bias + ReLU (VPU, f32)
    # TODO(synk): nn.Dropout(p=0.1) is identity in eval mode; training-mode dropout
    # would use pltpu.prng_seed(seed + pl.program_id(0)) + pltpu.stateful_bernoulli here.
    y = jnp.dot(h.astype(jnp.bfloat16), w2_ref[...],
                preferred_element_type=jnp.float32)        # MXU, f32 accumulate
    o_ref[...] = (y + b2_ref[...]).astype(o_ref.dtype)


def _round8(v):
    return ((v + 7) // 8) * 8


def positionwise_ffn(x, params, out_dtype=jnp.float32):
    """x: (..., d_model) -> (..., d_model), eval-mode PositionwiseFeedForward."""
    orig_shape = x.shape
    d_model, d_ff = params["w1"].shape
    assert orig_shape[-1] == d_model

    m = int(np.prod(orig_shape[:-1]))
    x2 = x.reshape(m, d_model).astype(jnp.float32)   # reshape is metadata-only

    # Row tile: as large as TM_MAX for few grid steps, but keep >=2 grid steps when
    # possible so "parallel" actually shards the row axis across v7x's two TensorCores.
    tm = max(8, min(TM_MAX, _round8(pl.cdiv(m, 2))))
    grid_m = pl.cdiv(m, tm)                           # ragged last block: no jnp.pad pass

    # bf16 weight feeds for the MXU (tiny arrays; cast cost negligible); biases stay f32.
    w1 = params["w1"].astype(jnp.bfloat16)
    w2 = params["w2"].astype(jnp.bfloat16)
    b1 = params["b1"].astype(jnp.float32).reshape(1, d_ff)
    b2 = params["b2"].astype(jnp.float32).reshape(1, d_model)

    out = pl.pallas_call(
        _ffn_kernel,
        out_shape=jax.ShapeDtypeStruct((m, d_model), out_dtype),
        grid_spec=pltpu.PrefetchScalarGridSpec(
            num_scalar_prefetch=0,
            grid=(grid_m,),
            in_specs=[
                pl.BlockSpec((tm, d_model), lambda i: (i, 0)),      # x rows (pipelined)
                pl.BlockSpec((d_model, d_ff), lambda i: (0, 0)),    # W1 (resident)
                pl.BlockSpec((1, d_ff), lambda i: (0, 0)),          # b1
                pl.BlockSpec((d_ff, d_model), lambda i: (0, 0)),    # W2 (resident)
                pl.BlockSpec((1, d_model), lambda i: (0, 0)),       # b2
            ],
            out_specs=pl.BlockSpec((tm, d_model), lambda i: (i, 0)),
        ),
        compiler_params=pltpu.CompilerParams(
            dimension_semantics=("parallel",)),   # shards row tiles across TCs on v7x
    )(x2, w1, b1, w2, b2)

    return out.reshape(orig_shape[:-1] + (d_model,))


def init_params(key, d_model=D_MODEL, d_ff=D_FF):
    """PyTorch-default nn.Linear init: uniform +/- 1/sqrt(fan_in) for weight and bias."""
    ks = jax.random.split(key, 4)

    def uinit(k, shape, fan_in):
        bound = 1.0 / np.sqrt(fan_in)
        return jax.random.uniform(k, shape, jnp.float32, -bound, bound)

    return dict(
        w1=uinit(ks[0], (d_model, d_ff), d_model),   # nn.Linear(d_model, d_ff).weight^T
        b1=uinit(ks[1], (d_ff,), d_model),
        w2=uinit(ks[2], (d_ff, d_model), d_ff),      # nn.Linear(d_ff, d_model).weight^T
        b2=uinit(ks[3], (d_model,), d_ff),
    )


def reference_forward(x, p):
    """Plain-JAX reference with the same bf16-dot / f32-accumulate dtype handling."""
    xb = x.astype(jnp.bfloat16)
    w1 = p["w1"].astype(jnp.bfloat16)
    w2 = p["w2"].astype(jnp.bfloat16)
    h = jnp.dot(xb, w1, preferred_element_type=jnp.float32) + p["b1"]
    h = jnp.maximum(h, 0.0)
    return jnp.dot(h.astype(jnp.bfloat16), w2,
                   preferred_element_type=jnp.float32) + p["b2"]


if __name__ == "__main__":
    key = jax.random.PRNGKey(0)
    k_x, k_p = jax.random.split(key)

    B, S = 2, 8                                   # small test shapes (m=16 -> 2 grid steps)
    x = jax.random.normal(k_x, (B, S, D_MODEL), dtype=jnp.float32)
    params = init_params(k_p)

    out = jax.block_until_ready(positionwise_ffn(x, params))

    ref = reference_forward(x, params)
    np.testing.assert_allclose(np.asarray(out), np.asarray(ref), rtol=2e-3, atol=2e-3)

    print("KERNEL_OK")
</pallas_src>

<mosaic_0001>
module attributes {stable_mosaic.version = 11 : i64} {
  func.func @_ffn_kernel(%arg0: i32, %arg1: memref<8x128xf32, #tpu.memory_space<vmem>>, %arg2: memref<128x512xbf16, #tpu.memory_space<vmem>>, %arg3: memref<1x512xf32, #tpu.memory_space<vmem>>, %arg4: memref<512x128xbf16, #tpu.memory_space<vmem>>, %arg5: memref<1x128xf32, #tpu.memory_space<vmem>>, %arg6: memref<8x128xf32, #tpu.memory_space<vmem>>) attributes {dimension_semantics = [#tpu.dimension_semantics<parallel>], iteration_bounds = array<i64: 2>, scalar_prefetch = 0 : i64, scratch_operands = 0 : i64, tpu.core_type = #tpu.core_type<tc>, window_params = [{transform_indices = @transform_0, window_bounds = array<i64: 8, 128>}, {pipeline_mode = #tpu.pipeline_mode<synchronous>, transform_indices = @transform_1, window_bounds = array<i64: 128, 512>}, {pipeline_mode = #tpu.pipeline_mode<synchronous>, transform_indices = @transform_2, window_bounds = array<i64: 1, 512>}, {pipeline_mode = #tpu.pipeline_mode<synchronous>, transform_indices = @transform_3, window_bounds = array<i64: 512, 128>}, {pipeline_mode = #tpu.pipeline_mode<synchronous>, transform_indices = @transform_4, window_bounds = array<i64: 1, 128>}, {transform_indices = @transform_5, window_bounds = array<i64: 8, 128>}]} {
    %c0 = arith.constant 0 : index
    %c0_0 = arith.constant 0 : index
    %0 = vector.load %arg1[%c0, %c0_0] : memref<8x128xf32, #tpu.memory_space<vmem>>, vector<8x128xf32>
    %1 = arith.truncf %0 : vector<8x128xf32> to vector<8x128xbf16>
    %c0_1 = arith.constant 0 : index
    %c0_2 = arith.constant 0 : index
    %2 = vector.load %arg2[%c0_1, %c0_2] : memref<128x512xbf16, #tpu.memory_space<vmem>>, vector<128x512xbf16>
    %cst = arith.constant dense<0.000000e+00> : vector<8x512xf32>
    %3 = tpu.matmul %1, %2, %cst {dimension_numbers = #tpu.dot_dimension_numbers<[1], [0], [0], [1], [0, 0, 1, 1], [], []>} : vector<8x128xbf16>, vector<128x512xbf16>, vector<8x512xf32> -> vector<8x512xf32>
    %c0_3 = arith.constant 0 : index
    %c0_4 = arith.constant 0 : index
    %4 = vector.load %arg3[%c0_3, %c0_4] : memref<1x512xf32, #tpu.memory_space<vmem>>, vector<1x512xf32>
    %5 = vector.broadcast %4 : vector<1x512xf32> to vector<8x512xf32>
    %6 = arith.addf %3, %5 : vector<8x512xf32>
    %cst_5 = arith.constant 0.000000e+00 : f32
    %7 = vector.broadcast %cst_5 : f32 to vector<8x512xf32>
    %8 = arith.maximumf %6, %7 : vector<8x512xf32>
    %9 = arith.truncf %8 : vector<8x512xf32> to vector<8x512xbf16>
    %c0_6 = arith.constant 0 : index
    %c0_7 = arith.constant 0 : index
    %10 = vector.load %arg4[%c0_6, %c0_7] : memref<512x128xbf16, #tpu.memory_space<vmem>>, vector<512x128xbf16>
    %cst_8 = arith.constant dense<0.000000e+00> : vector<8x128xf32>
    %11 = tpu.matmul %9, %10, %cst_8 {dimension_numbers = #tpu.dot_dimension_numbers<[1], [0], [0], [1], [0, 0, 1, 1], [], []>} : vector<8x512xbf16>, vector<512x128xbf16>, vector<8x128xf32> -> vector<8x128xf32>
    %c0_9 = arith.constant 0 : index
    %c0_10 = arith.constant 0 : index
    %12 = vector.load %arg5[%c0_9, %c0_10] : memref<1x128xf32, #tpu.memory_space<vmem>>, vector<1x128xf32>
    %13 = vector.broadcast %12 : vector<1x128xf32> to vector<8x128xf32>
    %14 = arith.addf %11, %13 : vector<8x128xf32>
    %c0_11 = arith.constant 0 : index
    %c0_12 = arith.constant 0 : index
    %15 = vector.load %arg6[%c0_11, %c0_12] : memref<8x128xf32, #tpu.memory_space<vmem>>, vector<8x128xf32>
    tpu.vector_store %arg6[%c0_11, %c0_12], %14 {strides = array<i32>} : memref<8x128xf32, #tpu.memory_space<vmem>>, vector<8x128xf32>,
    return
  }
  func.func @transform_0(%arg0: i32) -> (i32, i32) {
    %c0_i32 = arith.constant 0 : i32
    %c0_i32_0 = arith.constant 0 : i32
    return %arg0, %c0_i32 : i32, i32
  }
  func.func @transform_1(%arg0: i32) -> (i32, i32) {
    %c0_i32 = arith.constant 0 : i32
    %c0_i32_0 = arith.constant 0 : i32
    %c0_i32_1 = arith.constant 0 : i32
    return %c0_i32, %c0_i32_0 : i32, i32
  }
  func.func @transform_2(%arg0: i32) -> (i32, i32) {
    %c0_i32 = arith.constant 0 : i32
    %c0_i32_0 = arith.constant 0 : i32
    %c0_i32_1 = arith.constant 0 : i32
    return %c0_i32, %c0_i32_0 : i32, i32
  }
  func.func @transform_3(%arg0: i32) -> (i32, i32) {
    %c0_i32 = arith.constant 0 : i32
    %c0_i32_0 = arith.constant 0 : i32
    %c0_i32_1 = arith.constant 0 : i32
    return %c0_i32, %c0_i32_0 : i32, i32
  }
  func.func @transform_4(%arg0: i32) -> (i32, i32) {
    %c0_i32 = arith.constant 0 : i32
    %c0_i32_0 = arith.constant 0 : i32
    %c0_i32_1 = arith.constant 0 : i32
    return %c0_i32, %c0_i32_0 : i32, i32
  }
  func.func @transform_5(%arg0: i32) -> (i32, i32) {
    %c0_i32 = arith.constant 0 : i32
    %c0_i32_0 = arith.constant 0 : i32
    return %arg0, %c0_i32 : i32, i32
  }
}

</mosaic_0001>

<llo_original>
// kernel: tpu_custom_call.1
$region0: #{tpu_custom_call.1}
  #allocation0 [shape = 'u32[]', space=smem, size = 0x4, offset = 0x4, fixed_abs, tag = 'smem constant byte address 0x4 - core index']
  #allocation1 [shape = 'u32[144,128]{1,0:T(1,128)}', space=vmem, size = 0x12000, scoped, tag = 'internal scratch']
  %s0 = inlined_call_operand.hbm [shape: f32[16,128], index: 0, kind: input, shape index: {}]
  %s1 = inlined_call_operand.hbm [shape: bf16[128,512], index: 1, kind: input, shape index: {}]
  %s2 = inlined_call_operand.hbm [shape: f32[1,512], index: 2, kind: input, shape index: {}]
  %s3 = inlined_call_operand.hbm [shape: bf16[512,128], index: 3, kind: input, shape index: {}]
  %s4 = inlined_call_operand.vmem [shape: f32[1,128], index: 4, kind: input, shape index: {}]
  %s5 = inlined_call_operand.hbm [shape: f32[16,128], index: 5, kind: output, shape index: {}]
  %s6 = sld [smem:[#allocation0]]
  $region69: #{tpu_custom_call.1} parent=0
    _
  %s8 = ssub.s32 1, %s6
  %s9 = scalar_select 0, %s8, %s6
  $region1: #{tpu_custom_call.1} parent=0
    #allocation2 [shape = 'u8[8192]{0}', space=vmem, size = 0x2000, scoped, tag = 'input window, operand 0']
    #allocation3 [shape = 's32[2]{0}', space=sflag, size = 0x8, scoped, tag = 'scoped memory for tpu_custom_call.1']
    #allocation4 [shape = 's32[2]{0}', space=sflag, size = 0x8, scoped, tag = 'scoped memory for tpu_custom_call.1']
    #allocation5 [shape = 'u8[131072]{0}', space=vmem, size = 0x20000, scoped, tag = 'input window, operand 1, single buffered']
    #allocation6 [shape = 's32[1]{0}', space=sflag, size = 0x4, scoped, tag = 'scoped memory for tpu_custom_call.1']
    #allocation7 [shape = 'u8[2048]{0}', space=vmem, size = 0x800, scoped, tag = 'input window, operand 2, single buffered']
    #allocation8 [shape = 'u8[131072]{0}', space=vmem, size = 0x20000, scoped, tag = 'input window, operand 3, single buffered']
    #allocation9 [shape = 's32[1]{0}', space=sflag, size = 0x4, scoped, tag = 'scoped memory for tpu_custom_call.1']
    #allocation10 [shape = 'u8[8192]{0}', space=vmem, size = 0x2000, scoped, tag = 'output window, operand 0']
    %10 = vsyncpa [#allocation3], 0
    %s11 = scalar_lea.sflag [#allocation3], 1
    %12 = vsyncpa %s11, 0
    %13 = vsyncpa [#allocation6], 0
    %14 = vsyncpa [#allocation9], 0
    %15 = vsyncpa [#allocation4], 0
    %s16 = scalar_lea.sflag [#allocation4], 1
    %17 = vsyncpa %s16, 0
    loop: start=0, step=1, limit=4
    $region2: #{tpu_custom_call.1} parent=1 // loop_pre_header
      _
    $region3: #{tpu_custom_call.1} parent=1 // loop_header
      %s19 = sphi 0, %s23
      %p20 = scmp.ge.s32.totalorder %s19, 4
      %s29 = sphi 0, %s31
      %s32 = sphi 0, %s29
      %s33 = sphi 0, %s32
      %s49 = sphi 0, %s33
      %s53 = sphi 0, %s53
      %s55 = sphi 0, %s53
      %s56 = sphi 0, %s55
      %s70 = sphi 0, %s56
      %s74 = sphi 0, %s74
      %s76 = sphi 0, %s74
      %s77 = sphi 0, %s76
      %s91 = sphi 0, %s77
      %s95 = sphi 0, %s95
      %s97 = sphi 0, %s95
      %s98 = sphi 0, %s97
      %s112 = sphi 0, %s98
      %s116 = sphi 0, %s116
      %s118 = sphi 0, %s116
      %s119 = sphi 0, %s118
      %s133 = sphi 0, %s119
      %s139 = sphi 0, %s141
      %s142 = sphi 0, %s139
      %s143 = sphi 0, %s142
      %s159 = sphi 0, %s143
    $region4: #{tpu_custom_call.1} parent=1 // loop_header_branch
      %22 = sbr.rel (%p20) target = $region8
    $region5: #{tpu_custom_call.1} parent=1 // loop_body
      %s24 = ssub.s32 %s19, 1
      %s25 = ssub.s32 %s19, 2
      %s26 = sadd.s32 %s19, 1
      %s27 = ssub.s32 %s19, %s26
      %p28 = scmp.eq.s32.totalorder %s27, 0
      %s30 = sadd.s32 %s29, 1
      %s31 = scalar_select %p28, %s29, %s30
      %p34 = pneg %p28
      %p35 = scmp.eq.s32.totalorder %s19, 1
      %p36 = por %p34, %p35
      %p37 = scmp.ne.s32.totalorder %s29, %s32
      %p38 = scmp.eq.s32.totalorder %s19, 0
      %p39 = por %p37, %p38
      %p40 = scmp.ne.s32.totalorder %s29, %s32
      %p41 = scmp.eq.s32.totalorder %s24, 1
      %p42 = por %p40, %p41
      %p43 = scmp.ne.s32.totalorder %s32, %s33
      %p44 = scmp.eq.s32.totalorder %s24, 0
      %p45 = por %p43, %p44
      %p46 = scmp.ne.s32.totalorder %s32, %s33
      %p47 = scmp.eq.s32.totalorder %s25, 1
      %p48 = por %p46, %p47
      %p50 = scmp.ne.s32.totalorder %s33, %s49
      %p51 = scmp.eq.s32.totalorder %s25, 0
      %p52 = por %p50, %p51
      %s54 = sadd.s32 %s53, 1
      %p57 = scmp.eq.s32.totalorder %s19, 1
      %p58 = scmp.ne.s32.totalorder %s53, %s55
      %p59 = scmp.eq.s32.totalorder %s19, 0
      %p60 = por %p58, %p59
      %p61 = scmp.ne.s32.totalorder %s53, %s55
      %p62 = scmp.eq.s32.totalorder %s24, 1
      %p63 = por %p61, %p62
      %p64 = scmp.ne.s32.totalorder %s55, %s56
      %p65 = scmp.eq.s32.totalorder %s24, 0
      %p66 = por %p64, %p65
      %p67 = scmp.ne.s32.totalorder %s55, %s56
      %p68 = scmp.eq.s32.totalorder %s25, 1
      %p69 = por %p67, %p68
      %p71 = scmp.ne.s32.totalorder %s56, %s70
      %p72 = scmp.eq.s32.totalorder %s25, 0
      %p73 = por %p71, %p72
      %s75 = sadd.s32 %s74, 1
      %p78 = scmp.eq.s32.totalorder %s19, 1
      %p79 = scmp.ne.s32.totalorder %s74, %s76
      %p80 = scmp.eq.s32.totalorder %s19, 0
      %p81 = por %p79, %p80
      %p82 = scmp.ne.s32.totalorder %s74, %s76
      %p83 = scmp.eq.s32.totalorder %s24, 1
      %p84 = por %p82, %p83
      %p85 = scmp.ne.s32.totalorder %s76, %s77
      %p86 = scmp.eq.s32.totalorder %s24, 0
      %p87 = por %p85, %p86
      %p88 = scmp.ne.s32.totalorder %s76, %s77
      %p89 = scmp.eq.s32.totalorder %s25, 1
      %p90 = por %p88, %p89
      %p92 = scmp.ne.s32.totalorder %s77, %s91
      %p93 = scmp.eq.s32.totalorder %s25, 0
      %p94 = por %p92, %p93
      %s96 = sadd.s32 %s95, 1
      %p99 = scmp.eq.s32.totalorder %s19, 1
      %p100 = scmp.ne.s32.totalorder %s95, %s97
      %p101 = scmp.eq.s32.totalorder %s19, 0
      %p102 = por %p100, %p101
      %p103 = scmp.ne.s32.totalorder %s95, %s97
      %p104 = scmp.eq.s32.totalorder %s24, 1
      %p105 = por %p103, %p104
      %p106 = scmp.ne.s32.totalorder %s97, %s98
      %p107 = scmp.eq.s32.totalorder %s24, 0
      %p108 = por %p106, %p107
      %p109 = scmp.ne.s32.totalorder %s97, %s98
      %p110 = scmp.eq.s32.totalorder %s25, 1
      %p111 = por %p109, %p110
      %p113 = scmp.ne.s32.totalorder %s98, %s112
      %p114 = scmp.eq.s32.totalorder %s25, 0
      %p115 = por %p113, %p114
      %s117 = sadd.s32 %s116, 1
      %p120 = scmp.eq.s32.totalorder %s19, 1
      %p121 = scmp.ne.s32.totalorder %s116, %s118
      %p122 = scmp.eq.s32.totalorder %s19, 0
      %p123 = por %p121, %p122
      %p124 = scmp.ne.s32.totalorder %s116, %s118
      %p125 = scmp.eq.s32.totalorder %s24, 1
      %p126 = por %p124, %p125
      %p127 = scmp.ne.s32.totalorder %s118, %s119
      %p128 = scmp.eq.s32.totalorder %s24, 0
      %p129 = por %p127, %p128
      %p130 = scmp.ne.s32.totalorder %s118, %s119
      %p131 = scmp.eq.s32.totalorder %s25, 1
      %p132 = por %p130, %p131
      %p134 = scmp.ne.s32.totalorder %s119, %s133
      %p135 = scmp.eq.s32.totalorder %s25, 0
      %p136 = por %p134, %p135
      %s137 = ssub.s32 %s19, %s26
      %p138 = scmp.eq.s32.totalorder %s137, 0
      %s140 = sadd.s32 %s139, 1
      %s141 = scalar_select %p138, %s139, %s140
      %p144 = pneg %p138
      %p145 = scmp.eq.s32.totalorder %s19, 1
      %p146 = por %p144, %p145
      %p147 = scmp.ne.s32.totalorder %s139, %s142
      %p148 = scmp.eq.s32.totalorder %s19, 0
      %p149 = por %p147, %p148
      %p150 = scmp.ne.s32.totalorder %s139, %s142
      %p151 = scmp.eq.s32.totalorder %s24, 1
      %p152 = por %p150, %p151
      %p153 = scmp.ne.s32.totalorder %s142, %s143
      %p154 = scmp.eq.s32.totalorder %s24, 0
      %p155 = por %p153, %p154
      %p156 = scmp.ne.s32.totalorder %s142, %s143
      %p157 = scmp.eq.s32.totalorder %s25, 1
      %p158 = por %p156, %p157
      %p160 = scmp.ne.s32.totalorder %s143, %s159
      %p161 = scmp.eq.s32.totalorder %s25, 0
      %p162 = por %p160, %p161
      %p163 = scmp.le.s32.totalorder 1, %s19
      %p164 = scmp.lt.s32.totalorder %s19, 3
      %p165 = pnand %p163, %p164
      %p166 = pneg %p165
      // Predicated region
      $region9: #{tpu_custom_call.1} parent=5 // pred_check
        _
      $region10: #{tpu_custom_call.1} parent=5 // pred_check_branch
        %168 = sbr.rel (%p165) target = $region12
      $region11: #{tpu_custom_call.1} parent=5 // pred_region
        %s169 = ssub.s32 %s19, 1
        // Predicated region
        $region13: #{tpu_custom_call.1} parent=11 // pred_check
          %p170 = pneg %p66
        $region14: #{tpu_custom_call.1} parent=11 // pred_check_branch
          %172 = sbr.rel (%p170) target = $region16
        $region15: #{tpu_custom_call.1} parent=11 // pred_region
          %s174 = ssub.s32 4096, 4096
          %175 = vsyncadd [#allocation6], %s174
          %s176 = sshll.u32 [#allocation5], 4
          %s177 = int_to_ptr.vmem [resolvable:$true] %s176
          %182 = dma.hbm_to_vmem [thread:$0]  %s1, 4096, %s177, [#allocation6], 256, 256, 16
        $region16: #{tpu_custom_call.1} parent=11 // pred_fallthru
          _
        // Predicated region
        $region17: #{tpu_custom_call.1} parent=11 // pred_check
          %p183 = pneg %p87
        $region18: #{tpu_custom_call.1} parent=11 // pred_check_branch
          %185 = sbr.rel (%p183) target = $region20
        $region19: #{tpu_custom_call.1} parent=11 // pred_region
          %s187 = ssub.s32 64, 64
          %188 = vsyncadd [#allocation6], %s187
          %s190 = sshll.u32 [#allocation7], 4
          %s191 = int_to_ptr.vmem [resolvable:$true] %s190
          %193 = dma.hbm_to_vmem [thread:$0]  %s2, 64, %s191, [#allocation6]
        $region20: #{tpu_custom_call.1} parent=11 // pred_fallthru
          _
        // Predicated region
        $region21: #{tpu_custom_call.1} parent=11 // pred_check
          %p194 = pneg %p108
        $region22: #{tpu_custom_call.1} parent=11 // pred_check_branch
          %196 = sbr.rel (%p194) target = $region24
        $region23: #{tpu_custom_call.1} parent=11 // pred_region
          %s198 = ssub.s32 4096, 4096
          %199 = vsyncadd [#allocation9], %s198
          %s200 = sshll.u32 [#allocation8], 4
          %s201 = int_to_ptr.vmem [resolvable:$true] %s200
          %206 = dma.hbm_to_vmem [thread:$0]  %s3, 4096, %s201, [#allocation9], 64, 64, 4
        $region24: #{tpu_custom_call.1} parent=11 // pred_fallthru
          _
        // Predicated region
        $region25: #{tpu_custom_call.1} parent=11 // pred_check
          %p207 = pneg %p129
        $region26: #{tpu_custom_call.1} parent=11 // pred_check_branch
          %209 = sbr.rel (%p207) target = $region28
        $region27: #{tpu_custom_call.1} parent=11 // pred_region
          _
        $region28: #{tpu_custom_call.1} parent=11 // pred_fallthru
          _
      $region12: #{tpu_custom_call.1} parent=5 // pred_fallthru
        _
      %p210 = scmp.lt.s32.totalorder %s19, 2
      // Predicated region
      $region29: #{tpu_custom_call.1} parent=5 // pred_check
        %p211 = pneg %p210
      $region30: #{tpu_custom_call.1} parent=5 // pred_check_branch
        %213 = sbr.rel (%p211) target = $region32
      $region31: #{tpu_custom_call.1} parent=5 // pred_region
        // Predicated region
        $region33: #{tpu_custom_call.1} parent=31 // pred_check
          %p214 = pneg %p39
        $region34: #{tpu_custom_call.1} parent=31 // pred_check_branch
          %216 = sbr.rel (%p214) target = $region36
        $region35: #{tpu_custom_call.1} parent=31 // pred_region
          %s217 = sand.u32 %s29, 1
          %s218 = scalar_lea.sflag [#allocation3], %s217
          %s219 = sand.u32 %s29, 1
          %s220 = smul.addr %s219, 8
          %s221 = scalar_lea.vmem [#allocation2], %s220
          %s223 = ssub.s32 128, 128
          %224 = vsyncadd %s218, %s223
          %s225 = smul.addr %s19, 128
          %s226 = scalar_lea.hbm %s0, %s225
          %s228 = sshll.u32 %s221, 4
          %s229 = int_to_ptr.vmem [resolvable:$true] %s228
          %231 = dma.hbm_to_vmem [thread:$0]  %s226, 128, %s229, %s218
        $region36: #{tpu_custom_call.1} parent=31 // pred_fallthru
          _
      $region32: #{tpu_custom_call.1} parent=5 // pred_fallthru
        _
      %p232 = scmp.le.s32.totalorder 1, %s19
      %p233 = scmp.lt.s32.totalorder %s19, 3
      %p234 = pnand %p232, %p233
      %p235 = pneg %p234
      // Predicated region
      $region37: #{tpu_custom_call.1} parent=5 // pred_check
        _
      $region38: #{tpu_custom_call.1} parent=5 // pred_check_branch
        %237 = sbr.rel (%p234) target = $region40
      $region39: #{tpu_custom_call.1} parent=5 // pred_region
        %s238 = ssub.s32 %s19, 1
        %s239 = sand.u32 %s32, 1
        %s240 = scalar_lea.sflag [#allocation3], %s239
        %s241 = sand.u32 %s32, 1
        %s242 = smul.addr %s241, 8
        %s243 = scalar_lea.vmem [#allocation2], %s242
        // Predicated region
        $region41: #{tpu_custom_call.1} parent=39 // pred_check
          %p244 = pneg %p45
        $region42: #{tpu_custom_call.1} parent=39 // pred_check_branch
          %246 = sbr.rel (%p244) target = $region44
        $region43: #{tpu_custom_call.1} parent=39 // pred_region
          %247 = dma.done %s240, 128
        $region44: #{tpu_custom_call.1} parent=39 // pred_fallthru
          _
        // Predicated region
        $region45: #{tpu_custom_call.1} parent=39 // pred_check
          %p248 = pneg %p66
        $region46: #{tpu_custom_call.1} parent=39 // pred_check_branch
          %250 = sbr.rel (%p248) target = $region48
        $region47: #{tpu_custom_call.1} parent=39 // pred_region
          %251 = dma.done [#allocation6], 4096
        $region48: #{tpu_custom_call.1} parent=39 // pred_fallthru
          _
        // Predicated region
        $region49: #{tpu_custom_call.1} parent=39 // pred_check
          %p252 = pneg %p87
        $region50: #{tpu_custom_call.1} parent=39 // pred_check_branch
          %254 = sbr.rel (%p252) target = $region52
        $region51: #{tpu_custom_call.1} parent=39 // pred_region
          %255 = dma.done [#allocation6], 64
        $region52: #{tpu_custom_call.1} parent=39 // pred_fallthru
          _
        // Predicated region
        $region53: #{tpu_custom_call.1} parent=39 // pred_check
          %p256 = pneg %p108
        $region54: #{tpu_custom_call.1} parent=39 // pred_check_branch
          %258 = sbr.rel (%p256) target = $region56
        $region55: #{tpu_custom_call.1} parent=39 // pred_region
          %259 = dma.done [#allocation9], 4096
        $region56: #{tpu_custom_call.1} parent=39 // pred_fallthru
          _
        %s260 = sand.u32 %s32, 1
        %s261 = scalar_lea.sflag [#allocation3], %s260
        %s262 = sand.u32 %s32, 1
        %s263 = smul.addr %s262, 8
        %s264 = scalar_lea.vmem [#allocation2], %s263
        %p265 = pneg %p45
        %p266 = pneg %p42
        %p267 = pneg %p66
        %p268 = pneg %p63
        %p269 = pneg %p87
        %p270 = pneg %p84
        %p271 = pneg %p108
        %p272 = pneg %p105
        %p273 = pneg %p129
        %p274 = pneg %p126
        %p275 = pneg %p155
        %p276 = pneg %p152
        %s277 = sand.u32 %s142, 1
        %s278 = scalar_lea.sflag [#allocation4], %s277
        %s279 = sand.u32 %s142, 1
        %s280 = smul.addr %s279, 8
        %s281 = scalar_lea.vmem [#allocation10], %s280
        %v283 = vld [vmem:[%s243] sm:$0xff]
        %v284 = vpack.c.bf16 %v283, %v283
        %v285 = vld [vmem:[#allocation5] sm:$0xff]
        %v286 = vld [vmem:[#allocation5 + $0x8] sm:$0xff]
        %v287 = vld [vmem:[#allocation5 + $0x10] sm:$0xff]
        %v288 = vld [vmem:[#allocation5 + $0x18] sm:$0xff]
        %v289 = vld [vmem:[#allocation5 + $0x20] sm:$0xff]
        %v290 = vld [vmem:[#allocation5 + $0x28] sm:$0xff]
        %v291 = vld [vmem:[#allocation5 + $0x30] sm:$0xff]
        %v292 = vld [vmem:[#allocation5 + $0x38] sm:$0xff]
        %v293 = vld [vmem:[#allocation5 + $0x40] sm:$0xff]
        %v294 = vld [vmem:[#allocation5 + $0x48] sm:$0xff]
        %v295 = vld [vmem:[#allocation5 + $0x50] sm:$0xff]
        %v296 = vld [vmem:[#allocation5 + $0x58] sm:$0xff]
        %v297 = vld [vmem:[#allocation5 + $0x60] sm:$0xff]
        %v298 = vld [vmem:[#allocation5 + $0x68] sm:$0xff]
        %v299 = vld [vmem:[#allocation5 + $0x70] sm:$0xff]
        %v300 = vld [vmem:[#allocation5 + $0x78] sm:$0xff]
        %v301 = vld [vmem:[#allocation5 + $0x80] sm:$0xff]
        %v302 = vld [vmem:[#allocation5 + $0x88] sm:$0xff]
        %v303 = vld [vmem:[#allocation5 + $0x90] sm:$0xff]
        %v304 = vld [vmem:[#allocation5 + $0x98] sm:$0xff]
        %v305 = vld [vmem:[#allocation5 + $0xa0] sm:$0xff]
        %v306 = vld [vmem:[#allocation5 + $0xa8] sm:$0xff]
        %v307 = vld [vmem:[#allocation5 + $0xb0] sm:$0xff]
        %v308 = vld [vmem:[#allocation5 + $0xb8] sm:$0xff]
        %v309 = vld [vmem:[#allocation5 + $0xc0] sm:$0xff]
        %v310 = vld [vmem:[#allocation5 + $0xc8] sm:$0xff]
        %v311 = vld [vmem:[#allocation5 + $0xd0] sm:$0xff]
        %v312 = vld [vmem:[#allocation5 + $0xd8] sm:$0xff]
        %v313 = vld [vmem:[#allocation5 + $0xe0] sm:$0xff]
        %v314 = vld [vmem:[#allocation5 + $0xe8] sm:$0xff]
        %v315 = vld [vmem:[#allocation5 + $0xf0] sm:$0xff]
        %v316 = vld [vmem:[#allocation5 + $0xf8] sm:$0xff]
        %v317 = vld [vmem:[#allocation7] sm:$0xf]
        %v319 = vlaneseq
        %v320 = vshrl.u32 %v319, 7
        %v321 = vsub.s32 0, %v320
        %v322 = vrot.slane %v317, %v321
        %v323 = vlaneseq
        %v324 = vshrl.u32 %v323, 7
        %v325 = vsub.s32 1, %v324
        %v326 = vrot.slane %v317, %v325
        %v327 = vlaneseq
        %v328 = vshrl.u32 %v327, 7
        %v329 = vsub.s32 2, %v328
        %v330 = vrot.slane %v317, %v329
        %v331 = vlaneseq
        %v332 = vshrl.u32 %v331, 7
        %v333 = vsub.s32 3, %v332
        %v334 = vrot.slane %v317, %v333
        %v371 = vunpack.c.l.b16 %v285
        %v372 = vunpack.c.h.b16 %v285
        %v373 = vunpack.c.l.b16 %v286
        %v374 = vunpack.c.h.b16 %v286
        %v375 = vunpack.c.l.b16 %v287
        %v376 = vunpack.c.h.b16 %v287
        %v377 = vunpack.c.l.b16 %v288
        %v378 = vunpack.c.h.b16 %v288
        %v379 = vunpack.c.l.b16 %v289
        %v380 = vunpack.c.h.b16 %v289
        %v381 = vunpack.c.l.b16 %v290
        %v382 = vunpack.c.h.b16 %v290
        %v383 = vunpack.c.l.b16 %v291
        %v384 = vunpack.c.h.b16 %v291
        %v385 = vunpack.c.l.b16 %v292
        %v386 = vunpack.c.h.b16 %v292
        %v387 = vunpack.c.l.b16 %v293
        %v388 = vunpack.c.h.b16 %v293
        %v389 = vunpack.c.l.b16 %v294
        %v390 = vunpack.c.h.b16 %v294
        %v391 = vunpack.c.l.b16 %v295
        %v392 = vunpack.c.h.b16 %v295
        %v393 = vunpack.c.l.b16 %v296
        %v394 = vunpack.c.h.b16 %v296
        %v395 = vunpack.c.l.b16 %v297
        %v396 = vunpack.c.h.b16 %v297
        %v397 = vunpack.c.l.b16 %v298
        %v398 = vunpack.c.h.b16 %v298
        %v399 = vunpack.c.l.b16 %v299
        %v400 = vunpack.c.h.b16 %v299
        %v401 = vunpack.c.l.b16 %v300
        %v402 = vunpack.c.h.b16 %v300
        %v403 = vunpack.c.l.b16 %v301
        %v404 = vunpack.c.h.b16 %v301
        %v405 = vunpack.c.l.b16 %v302
        %v406 = vunpack.c.h.b16 %v302
        %v407 = vunpack.c.l.b16 %v303
        %v408 = vunpack.c.h.b16 %v303
        %v409 = vunpack.c.l.b16 %v304
        %v410 = vunpack.c.h.b16 %v304
        %v411 = vunpack.c.l.b16 %v305
        %v412 = vunpack.c.h.b16 %v305
        %v413 = vunpack.c.l.b16 %v306
        %v414 = vunpack.c.h.b16 %v306
        %v415 = vunpack.c.l.b16 %v307
        %v416 = vunpack.c.h.b16 %v307
        %v417 = vunpack.c.l.b16 %v308
        %v418 = vunpack.c.h.b16 %v308
        %v419 = vunpack.c.l.b16 %v309
        %v420 = vunpack.c.h.b16 %v309
        %v421 = vunpack.c.l.b16 %v310
        %v422 = vunpack.c.h.b16 %v310
        %v423 = vunpack.c.l.b16 %v311
        %v424 = vunpack.c.h.b16 %v311
        %v425 = vunpack.c.l.b16 %v312
        %v426 = vunpack.c.h.b16 %v312
        %v427 = vunpack.c.l.b16 %v313
        %v428 = vunpack.c.h.b16 %v313
        %v429 = vunpack.c.l.b16 %v314
        %v430 = vunpack.c.h.b16 %v314
        %v431 = vunpack.c.l.b16 %v315
        %v432 = vunpack.c.h.b16 %v315
        %v433 = vunpack.c.l.b16 %v316
        %v434 = vunpack.c.h.b16 %v316
        %v435 = vpack.c.b16 %v375, %v371
        %v436 = vpack.c.b16 %v376, %v372
        %v437 = vpack.c.b16 %v377, %v373
        %v438 = vpack.c.b16 %v378, %v374
        %v439 = vpack.c.b16 %v383, %v379
        %v440 = vpack.c.b16 %v384, %v380
        %v441 = vpack.c.b16 %v385, %v381
        %v442 = vpack.c.b16 %v386, %v382
        %v443 = vpack.c.b16 %v391, %v387
        %v444 = vpack.c.b16 %v392, %v388
        %v445 = vpack.c.b16 %v393, %v389
        %v446 = vpack.c.b16 %v394, %v390
        %v447 = vpack.c.b16 %v399, %v395
        %v448 = vpack.c.b16 %v400, %v396
        %v449 = vpack.c.b16 %v401, %v397
        %v450 = vpack.c.b16 %v402, %v398
        %v451 = vpack.c.b16 %v407, %v403
        %v452 = vpack.c.b16 %v408, %v404
        %v453 = vpack.c.b16 %v409, %v405
        %v454 = vpack.c.b16 %v410, %v406
        %v455 = vpack.c.b16 %v415, %v411
        %v456 = vpack.c.b16 %v416, %v412
        %v457 = vpack.c.b16 %v417, %v413
        %v458 = vpack.c.b16 %v418, %v414
        %v459 = vpack.c.b16 %v423, %v419
        %v460 = vpack.c.b16 %v424, %v420
        %v461 = vpack.c.b16 %v425, %v421
        %v462 = vpack.c.b16 %v426, %v422
        %v463 = vpack.c.b16 %v431, %v427
        %v464 = vpack.c.b16 %v432, %v428
        %v465 = vpack.c.b16 %v433, %v429
        %v466 = vpack.c.b16 %v434, %v430
        %499 = vmatprep.subr.bf16.mxu0 %v464
        %500 = vmatpush1.bf16.msra.mxu0 %v463
        %501 = vmatprep.subr.bf16.mxu0 %v460
        %502 = vmatpush1.bf16.msra.mxu0 %v459
        %503 = vmatprep.subr.bf16.mxu0 %v456
        %504 = vmatpush1.bf16.msra.mxu0 %v455
        %505 = vmatprep.subr.bf16.mxu0 %v452
        %506 = vmatpush1.bf16.msra.mxu0 %v451
        %507 = vmatprep.subr.bf16.mxu0 %v448
        %508 = vmatpush1.bf16.msra.mxu0 %v447
        %509 = vmatprep.subr.bf16.mxu0 %v444
        %510 = vmatpush1.bf16.msra.mxu0 %v443
        %511 = vmatprep.subr.bf16.mxu0 %v440
        %512 = vmatpush1.bf16.msra.mxu0 %v439
        %513 = vmatprep.subr.bf16.mxu0 %v436
        %514 = vmatpush1.bf16.msra.mxu0 %v435
        %515 = vmatprep.subr.bf16.mxu0 0
        %516 = vmatpush2.bf16.msra.mxu0 0
        %517 = vmatprep.subr.bf16.mxu0 0
        %518 = vmatpush2.bf16.msra.mxu0 0
        %519 = vmatprep.subr.bf16.mxu0 0
        %520 = vmatpush2.bf16.msra.mxu0 0
        %521 = vmatprep.subr.bf16.mxu0 0
        %522 = vmatpush2.bf16.msra.mxu0 0
        %523 = vmatprep.subr.bf16.mxu0 0
        %524 = vmatpush2.bf16.msra.mxu0 0
        %525 = vmatprep.subr.bf16.mxu0 0
        %526 = vmatpush2.bf16.msra.mxu0 0
        %527 = vmatprep.subr.bf16.mxu0 0
        %528 = vmatpush2.bf16.msra.mxu0 0
        %529 = vmatprep.subr.bf16.mxu0 0
        %530 = vmatpush2.bf16.msra.mxu0 0
        %531 = vmatprep.mubr.bf16.mxu0 0
        %532 = vmatmul.mubr.bf16.gmra.mxu0 %v284
        %v533 = vpop.f32.mrf.mxu0
        %v534 = vadd.f32 %v322, %v533
        %v535 = vpop.f32.mrf.mxu0
        %v536 = vadd.f32 %v326, %v535
        %v537 = vpop.f32.mrf.mxu0
        %v538 = vpop.f32.mrf.mxu0
        %539 = vdwg.mxu0
        %540 = vmatprep.subr.bf16.mxu0 %v466
        %541 = vmatpush1.bf16.msra.mxu0 %v465
        %542 = vmatprep.subr.bf16.mxu0 %v462
        %543 = vmatpush1.bf16.msra.mxu0 %v461
        %544 = vmatprep.subr.bf16.mxu0 %v458
        %545 = vmatpush1.bf16.msra.mxu0 %v457
        %546 = vmatprep.subr.bf16.mxu0 %v454
        %547 = vmatpush1.bf16.msra.mxu0 %v453
        %548 = vmatprep.subr.bf16.mxu0 %v450
        %549 = vmatpush1.bf16.msra.mxu0 %v449
        %550 = vmatprep.subr.bf16.mxu0 %v446
        %551 = vmatpush1.bf16.msra.mxu0 %v445
        %552 = vmatprep.subr.bf16.mxu0 %v442
        %553 = vmatpush1.bf16.msra.mxu0 %v441
        %554 = vmatprep.subr.bf16.mxu0 %v438
        %555 = vmatpush1.bf16.msra.mxu0 %v437
        %556 = vmatprep.subr.bf16.mxu0 0
        %557 = vmatpush2.bf16.msra.mxu0 0
        %558 = vmatprep.subr.bf16.mxu0 0
        %559 = vmatpush2.bf16.msra.mxu0 0
        %560 = vmatprep.subr.bf16.mxu0 0
        %561 = vmatpush2.bf16.msra.mxu0 0
        %562 = vmatprep.subr.bf16.mxu0 0
        %563 = vmatpush2.bf16.msra.mxu0 0
        %564 = vmatprep.subr.bf16.mxu0 0
        %565 = vmatpush2.bf16.msra.mxu0 0
        %566 = vmatprep.subr.bf16.mxu0 0
        %567 = vmatpush2.bf16.msra.mxu0 0
        %568 = vmatprep.subr.bf16.mxu0 0
        %569 = vmatpush2.bf16.msra.mxu0 0
        %570 = vmatprep.subr.bf16.mxu0 0
        %571 = vmatpush2.bf16.msra.mxu0 0
        %572 = vmatprep.mubr.bf16.mxu0 0
        %573 = vmatmul.mubr.bf16.gmra.mxu0 %v284
        %v574 = vpop.f32.mrf.mxu0
        %v575 = vadd.f32 %v330, %v574
        %v576 = vpop.f32.mrf.mxu0
        %v577 = vadd.f32 %v334, %v576
        %v578 = vpop.f32.mrf.mxu0
        %v579 = vpop.f32.mrf.mxu0
        %580 = vdwg.mxu0
        %v581 = vmax.f32 %v534, 0.0
        %v582 = vmax.f32 %v536, 0.0
        %v583 = vmax.f32 %v575, 0.0
        %v584 = vmax.f32 %v577, 0.0
        %v585 = vpack.c.bf16 %v581, %v581
        %v586 = vpack.c.bf16 %v582, %v582
        %v587 = vpack.c.bf16 %v583, %v583
        %v588 = vpack.c.bf16 %v584, %v584
        %v589 = vld [vmem:[#allocation8] sm:$0xf]
        %v590 = vld [vmem:[#allocation8 + $0x4] sm:$0xf]
        %v591 = vld [vmem:[#allocation8 + $0x8] sm:$0xf]
        %v592 = vld [vmem:[#allocation8 + $0xc] sm:$0xf]
        %v593 = vld [vmem:[#allocation8 + $0x10] sm:$0xf]
        %v594 = vld [vmem:[#allocation8 + $0x14] sm:$0xf]
        %v595 = vld [vmem:[#allocation8 + $0x18] sm:$0xf]
        %v596 = vld [vmem:[#allocation8 + $0x1c] sm:$0xf]
        %v597 = vld [vmem:[#allocation8 + $0x20] sm:$0xf]
        %v598 = vld [vmem:[#allocation8 + $0x24] sm:$0xf]
        %v599 = vld [vmem:[#allocation8 + $0x28] sm:$0xf]
        %v600 = vld [vmem:[#allocation8 + $0x2c] sm:$0xf]
        %v601 = vld [vmem:[#allocation8 + $0x30] sm:$0xf]
        %v602 = vld [vmem:[#allocation8 + $0x34] sm:$0xf]
        %v603 = vld [vmem:[#allocation8 + $0x38] sm:$0xf]
        %v604 = vld [vmem:[#allocation8 + $0x3c] sm:$0xf]
        %v605 = vld [vmem:[#allocation8 + $0x40] sm:$0xf]
        %v606 = vld [vmem:[#allocation8 + $0x44] sm:$0xf]
        %v607 = vld [vmem:[#allocation8 + $0x48] sm:$0xf]
        %v608 = vld [vmem:[#allocation8 + $0x4c] sm:$0xf]
        %v609 = vld [vmem:[#allocation8 + $0x50] sm:$0xf]
        %v610 = vld [vmem:[#allocation8 + $0x54] sm:$0xf]
        %v611 = vld [vmem:[#allocation8 + $0x58] sm:$0xf]
        %v612 = vld [vmem:[#allocation8 + $0x5c] sm:$0xf]
        %v613 = vld [vmem:[#allocation8 + $0x60] sm:$0xf]
        %v614 = vld [vmem:[#allocation8 + $0x64] sm:$0xf]
        %v615 = vld [vmem:[#allocation8 + $0x68] sm:$0xf]
        %v616 = vld [vmem:[#allocation8 + $0x6c] sm:$0xf]
        %v617 = vld [vmem:[#allocation8 + $0x70] sm:$0xf]
        %v618 = vld [vmem:[#allocation8 + $0x74] sm:$0xf]
        %v619 = vld [vmem:[#allocation8 + $0x78] sm:$0xf]
        %v620 = vld [vmem:[#allocation8 + $0x7c] sm:$0xf]
        %v621 = vld [vmem:[#allocation8 + $0x80] sm:$0xf]
        %v622 = vld [vmem:[#allocation8 + $0x84] sm:$0xf]
        %v623 = vld [vmem:[#allocation8 + $0x88] sm:$0xf]
        %v624 = vld [vmem:[#allocation8 + $0x8c] sm:$0xf]
        %v625 = vld [vmem:[#allocation8 + $0x90] sm:$0xf]
        %v626 = vld [vmem:[#allocation8 + $0x94] sm:$0xf]
        %v627 = vld [vmem:[#allocation8 + $0x98] sm:$0xf]
        %v628 = vld [vmem:[#allocation8 + $0x9c] sm:$0xf]
        %v629 = vld [vmem:[#allocation8 + $0xa0] sm:$0xf]
        %v630 = vld [vmem:[#allocation8 + $0xa4] sm:$0xf]
        %v631 = vld [vmem:[#allocation8 + $0xa8] sm:$0xf]
        %v632 = vld [vmem:[#allocation8 + $0xac] sm:$0xf]
        %v633 = vld [vmem:[#allocation8 + $0xb0] sm:$0xf]
        %v634 = vld [vmem:[#allocation8 + $0xb4] sm:$0xf]
        %v635 = vld [vmem:[#allocation8 + $0xb8] sm:$0xf]
        %v636 = vld [vmem:[#allocation8 + $0xbc] sm:$0xf]
        %v637 = vld [vmem:[#allocation8 + $0xc0] sm:$0xf]
        %v638 = vld [vmem:[#allocation8 + $0xc4] sm:$0xf]
        %v639 = vld [vmem:[#allocation8 + $0xc8] sm:$0xf]
        %v640 = vld [vmem:[#allocation8 + $0xcc] sm:$0xf]
        %v641 = vld [vmem:[#allocation8 + $0xd0] sm:$0xf]
        %v642 = vld [vmem:[#allocation8 + $0xd4] sm:$0xf]
        %v643 = vld [vmem:[#allocation8 + $0xd8] sm:$0xf]
        %v644 = vld [vmem:[#allocation8 + $0xdc] sm:$0xf]
        %v645 = vld [vmem:[#allocation8 + $0xe0] sm:$0xf]
        %v646 = vld [vmem:[#allocation8 + $0xe4] sm:$0xf]
        %v647 = vld [vmem:[#allocation8 + $0xe8] sm:$0xf]
        %v648 = vld [vmem:[#allocation8 + $0xec] sm:$0xf]
        %v649 = vld [vmem:[#allocation8 + $0xf0] sm:$0xf]
        %v650 = vld [vmem:[#allocation8 + $0xf4] sm:$0xf]
        %v651 = vld [vmem:[#allocation8 + $0xf8] sm:$0xf]
        %v652 = vld [vmem:[#allocation8 + $0xfc] sm:$0xf]
        %v653 = vld [vmem:[%s4] sm:$0x1]
        %v655 = vlaneseq
        %v656 = vshrl.u32 %v655, 7
        %v657 = vsub.s32 0, %v656
        %v658 = vrot.slane %v653, %v657
        %v724 = vunpack.c.l.b16 %v589
        %v725 = vunpack.c.l.b16 %v590
        %v726 = vunpack.c.l.b16 %v591
        %v727 = vunpack.c.l.b16 %v592
        %v728 = vunpack.c.l.b16 %v593
        %v729 = vunpack.c.l.b16 %v594
        %v730 = vunpack.c.l.b16 %v595
        %v731 = vunpack.c.l.b16 %v596
        %v732 = vunpack.c.l.b16 %v597
        %v733 = vunpack.c.l.b16 %v598
        %v734 = vunpack.c.l.b16 %v599
        %v735 = vunpack.c.l.b16 %v600
        %v736 = vunpack.c.l.b16 %v601
        %v737 = vunpack.c.l.b16 %v602
        %v738 = vunpack.c.l.b16 %v603
        %v739 = vunpack.c.l.b16 %v604
        %v740 = vunpack.c.l.b16 %v605
        %v741 = vunpack.c.l.b16 %v606
        %v742 = vunpack.c.l.b16 %v607
        %v743 = vunpack.c.l.b16 %v608
        %v744 = vunpack.c.l.b16 %v609
        %v745 = vunpack.c.l.b16 %v610
        %v746 = vunpack.c.l.b16 %v611
        %v747 = vunpack.c.l.b16 %v612
        %v748 = vunpack.c.l.b16 %v613
        %v749 = vunpack.c.l.b16 %v614
        %v750 = vunpack.c.l.b16 %v615
        %v751 = vunpack.c.l.b16 %v616
        %v752 = vunpack.c.l.b16 %v617
        %v753 = vunpack.c.l.b16 %v618
        %v754 = vunpack.c.l.b16 %v619
        %v755 = vunpack.c.l.b16 %v620
        %v756 = vunpack.c.l.b16 %v621
        %v757 = vunpack.c.l.b16 %v622
        %v758 = vunpack.c.l.b16 %v623
        %v759 = vunpack.c.l.b16 %v624
        %v760 = vunpack.c.l.b16 %v625
        %v761 = vunpack.c.l.b16 %v626
        %v762 = vunpack.c.l.b16 %v627
        %v763 = vunpack.c.l.b16 %v628
        %v764 = vunpack.c.l.b16 %v629
        %v765 = vunpack.c.l.b16 %v630
        %v766 = vunpack.c.l.b16 %v631
        %v767 = vunpack.c.l.b16 %v632
        %v768 = vunpack.c.l.b16 %v633
        %v769 = vunpack.c.l.b16 %v634
        %v770 = vunpack.c.l.b16 %v635
        %v771 = vunpack.c.l.b16 %v636
        %v772 = vunpack.c.l.b16 %v637
        %v773 = vunpack.c.l.b16 %v638
        %v774 = vunpack.c.l.b16 %v639
        %v775 = vunpack.c.l.b16 %v640
        %v776 = vunpack.c.l.b16 %v641
        %v777 = vunpack.c.l.b16 %v642
        %v778 = vunpack.c.l.b16 %v643
        %v779 = vunpack.c.l.b16 %v644
        %v780 = vunpack.c.l.b16 %v645
        %v781 = vunpack.c.l.b16 %v646
        %v782 = vunpack.c.l.b16 %v647
        %v783 = vunpack.c.l.b16 %v648
        %v784 = vunpack.c.l.b16 %v649
        %v785 = vunpack.c.l.b16 %v650
        %v786 = vunpack.c.l.b16 %v651
        %v787 = vunpack.c.l.b16 %v652
        %v788 = vpack.c.b16 %v725, %v724
        %v789 = vpack.c.b16 %v727, %v726
        %v790 = vpack.c.b16 %v729, %v728
        %v791 = vpack.c.b16 %v731, %v730
        %v792 = vpack.c.b16 %v733, %v732
        %v793 = vpack.c.b16 %v735, %v734
        %v794 = vpack.c.b16 %v737, %v736
        %v795 = vpack.c.b16 %v739, %v738
        %v796 = vpack.c.b16 %v741, %v740
        %v797 = vpack.c.b16 %v743, %v742
        %v798 = vpack.c.b16 %v745, %v744
        %v799 = vpack.c.b16 %v747, %v746
        %v800 = vpack.c.b16 %v749, %v748
        %v801 = vpack.c.b16 %v751, %v750
        %v802 = vpack.c.b16 %v753, %v752
        %v803 = vpack.c.b16 %v755, %v754
        %v804 = vpack.c.b16 %v757, %v756
        %v805 = vpack.c.b16 %v759, %v758
        %v806 = vpack.c.b16 %v761, %v760
        %v807 = vpack.c.b16 %v763, %v762
        %v808 = vpack.c.b16 %v765, %v764
        %v809 = vpack.c.b16 %v767, %v766
        %v810 = vpack.c.b16 %v769, %v768
        %v811 = vpack.c.b16 %v771, %v770
        %v812 = vpack.c.b16 %v773, %v772
        %v813 = vpack.c.b16 %v775, %v774
        %v814 = vpack.c.b16 %v777, %v776
        %v815 = vpack.c.b16 %v779, %v778
        %v816 = vpack.c.b16 %v781, %v780
        %v817 = vpack.c.b16 %v783, %v782
        %v818 = vpack.c.b16 %v785, %v784
        %v819 = vpack.c.b16 %v787, %v786
        %852 = vmatprep.subr.bf16.mxu0 0
        %853 = vmatpush1.bf16.msra.mxu0 %v795
        %854 = vmatprep.subr.bf16.mxu0 0
        %855 = vmatpush1.bf16.msra.mxu0 %v794
        %856 = vmatprep.subr.bf16.mxu0 0
        %857 = vmatpush1.bf16.msra.mxu0 %v793
        %858 = vmatprep.subr.bf16.mxu0 0
        %859 = vmatpush1.bf16.msra.mxu0 %v792
        %860 = vmatprep.subr.bf16.mxu0 0
        %861 = vmatpush1.bf16.msra.mxu0 %v791
        %862 = vmatprep.subr.bf16.mxu0 0
        %863 = vmatpush1.bf16.msra.mxu0 %v790
        %864 = vmatprep.subr.bf16.mxu0 0
        %865 = vmatpush1.bf16.msra.mxu0 %v789
        %866 = vmatprep.subr.bf16.mxu0 0
        %867 = vmatpush1.bf16.msra.mxu0 %v788
        %868 = vmatprep.subr.bf16.mxu0 0
        %869 = vmatpush2.bf16.msra.mxu0 %v803
        %870 = vmatprep.subr.bf16.mxu0 0
        %871 = vmatpush2.bf16.msra.mxu0 %v802
        %872 = vmatprep.subr.bf16.mxu0 0
        %873 = vmatpush2.bf16.msra.mxu0 %v801
        %874 = vmatprep.subr.bf16.mxu0 0
        %875 = vmatpush2.bf16.msra.mxu0 %v800
        %876 = vmatprep.subr.bf16.mxu0 0
        %877 = vmatpush2.bf16.msra.mxu0 %v799
        %878 = vmatprep.subr.bf16.mxu0 0
        %879 = vmatpush2.bf16.msra.mxu0 %v798
        %880 = vmatprep.subr.bf16.mxu0 0
        %881 = vmatpush2.bf16.msra.mxu0 %v797
        %882 = vmatprep.subr.bf16.mxu0 0
        %883 = vmatpush2.bf16.msra.mxu0 %v796
        %884 = vmatprep.mubr.bf16.mxu0 %v586
        %885 = vmatmul.mubr.bf16.gmra.mxu0 %v585
        %v886 = vpop.f32.mrf.mxu0
        %v887 = vadd.f32 %v658, %v886
        %v888 = vpop.f32.mrf.mxu0
        %v889 = vpop.f32.mrf.mxu0
        %v890 = vpop.f32.mrf.mxu0
        %891 = vdwg.mxu0
        %892 = vmatprep.subr.bf16.mxu0 0
        %893 = vmatpush1.bf16.msra.mxu0 %v811
        %894 = vmatprep.subr.bf16.mxu0 0
        %895 = vmatpush1.bf16.msra.mxu0 %v810
        %896 = vmatprep.subr.bf16.mxu0 0
        %897 = vmatpush1.bf16.msra.mxu0 %v809
        %898 = vmatprep.subr.bf16.mxu0 0
        %899 = vmatpush1.bf16.msra.mxu0 %v808
        %900 = vmatprep.subr.bf16.mxu0 0
        %901 = vmatpush1.bf16.msra.mxu0 %v807
        %902 = vmatprep.subr.bf16.mxu0 0
        %903 = vmatpush1.bf16.msra.mxu0 %v806
        %904 = vmatprep.subr.bf16.mxu0 0
        %905 = vmatpush1.bf16.msra.mxu0 %v805
        %906 = vmatprep.subr.bf16.mxu0 0
        %907 = vmatpush1.bf16.msra.mxu0 %v804
        %908 = vmatprep.subr.bf16.mxu0 0
        %909 = vmatpush2.bf16.msra.mxu0 %v819
        %910 = vmatprep.subr.bf16.mxu0 0
        %911 = vmatpush2.bf16.msra.mxu0 %v818
        %912 = vmatprep.subr.bf16.mxu0 0
        %913 = vmatpush2.bf16.msra.mxu0 %v817
        %914 = vmatprep.subr.bf16.mxu0 0
        %915 = vmatpush2.bf16.msra.mxu0 %v816
        %916 = vmatprep.subr.bf16.mxu0 0
        %917 = vmatpush2.bf16.msra.mxu0 %v815
        %918 = vmatprep.subr.bf16.mxu0 0
        %919 = vmatpush2.bf16.msra.mxu0 %v814
        %920 = vmatprep.subr.bf16.mxu0 0
        %921 = vmatpush2.bf16.msra.mxu0 %v813
        %922 = vmatprep.subr.bf16.mxu0 0
        %923 = vmatpush2.bf16.msra.mxu0 %v812
        %924 = vmatprep.mubr.bf16.mxu0 %v588
        %925 = vmatmul.mubr.bf16.gmra.mxu0 %v587
        %v926 = vpop.f32.mrf.mxu0
        %v927 = vadd.f32 %v887, %v926
        %v928 = vpop.f32.mrf.mxu0
        %v929 = vpop.f32.mrf.mxu0
        %v930 = vpop.f32.mrf.mxu0
        %931 = vdwg.mxu0
        %932 = vst [vmem:[%s281] sm:$0xff] %v927
        %s933 = sand.u32 %s142, 1
        %s934 = scalar_lea.sflag [#allocation4], %s933
        %s935 = sand.u32 %s142, 1
        %s936 = smul.addr %s935, 8
        %s937 = scalar_lea.vmem [#allocation10], %s936
        // Predicated region
        $region57: #{tpu_custom_call.1} parent=39 // pred_check
          %p938 = pneg %p152
        $region58: #{tpu_custom_call.1} parent=39 // pred_check_branch
          %940 = sbr.rel (%p938) target = $region60
        $region59: #{tpu_custom_call.1} parent=39 // pred_region
          %s942 = ssub.s32 128, 128
          %943 = vsyncadd %s934, %s942
          %s944 = smul.addr %s24, 128
          %s945 = scalar_lea.hbm %s5, %s944
          %s947 = sshll.u32 %s937, 4
          %s948 = int_to_ptr.vmem [resolvable:$true] %s947
          %950 = dma.vmem_to_hbm [thread:$0]  %s948, 128, %s945, %s934
        $region60: #{tpu_custom_call.1} parent=39 // pred_fallthru
          _
      $region40: #{tpu_custom_call.1} parent=5 // pred_fallthru
        _
      %p951 = scmp.le.s32.totalorder 2, %s19
      // Predicated region
      $region61: #{tpu_custom_call.1} parent=5 // pred_check
        %p952 = pneg %p951
      $region62: #{tpu_custom_call.1} parent=5 // pred_check_branch
        %954 = sbr.rel (%p952) target = $region64
      $region63: #{tpu_custom_call.1} parent=5 // pred_region
        %s955 = ssub.s32 %s19, 2
        // Predicated region
        $region65: #{tpu_custom_call.1} parent=63 // pred_check
          %p956 = pneg %p158
        $region66: #{tpu_custom_call.1} parent=63 // pred_check_branch
          %958 = sbr.rel (%p956) target = $region68
        $region67: #{tpu_custom_call.1} parent=63 // pred_region
          %s959 = sand.u32 %s143, 1
          %s960 = scalar_lea.sflag [#allocation4], %s959
          %s961 = sand.u32 %s143, 1
          %s962 = smul.addr %s961, 8
          %s963 = scalar_lea.vmem [#allocation10], %s962
          %964 = dma.done %s960, 128
        $region68: #{tpu_custom_call.1} parent=63 // pred_fallthru
          _
      $region64: #{tpu_custom_call.1} parent=5 // pred_fallthru
        _
    $region6: #{tpu_custom_call.1} parent=1 // loop_footer
      %s23 = sadd.s32 1, %s19
    $region7: #{tpu_custom_call.1} parent=1 // loop_footer_branch
      %18 = sbr.rel target = $region3
    $region8: #{tpu_custom_call.1} parent=1 // loop_exit
      _
    %965 = vsyncpa [#allocation3], 1
    %s966 = scalar_lea.sflag [#allocation3], 1
    %967 = vsyncpa %s966, 1
    %968 = vsyncpa [#allocation6], 1
    %969 = vsyncpa [#allocation9], 1
    %970 = vsyncpa [#allocation4], 1
    %s971 = scalar_lea.sflag [#allocation4], 1
    %972 = vsyncpa %s971, 1

</llo_original>
